<compile_context>
chip_gen: v7x
topology: tpu7x:2x2x1
jax: 0.10.0
libtpu: 0.0.40
codegen_flags: <defaults>
</compile_context>

<pallas_src>
import functools

import jax
import jax.numpy as jnp
from jax.experimental import pallas as pl
from jax.experimental.pallas import tpu as pltpu


def _round_up(x, m):
    return ((x + m - 1) // m) * m


def _lstm_mwe_kernel(len_ref, x_ref, wx_ref, wh_ref, bg_ref, wll_ref, bll_ref,
                     o_ref, xp_ref):
    """One batch tile: hoisted x-projection, masked LSTM recurrence, fused Linear."""
    bb, T, D = x_ref.shape
    H = wh_ref.shape[0]
    G = 4 * H

    lengths = len_ref[...]                              # [bb, 1] int32
    w_h = wh_ref[...].astype(jnp.float32)               # [H, 4H] resident, cast once

    # ---- Hoisted input projection: one large MXU matmul for ALL timesteps ----
    # (was a K=D matmul per step on the serial critical path; bias folded in too).
    x2 = x_ref[...].reshape(bb * T, D)
    xp = jnp.dot(x2, wx_ref[...], preferred_element_type=jnp.float32)
    xp = xp + bg_ref[...].astype(jnp.float32)           # b_ih + b_hh, pre-summed
    xp_ref[...] = xp.reshape(bb, T, G)

    h0 = jnp.zeros((bb, H), jnp.float32)
    c0 = jnp.zeros((bb, H), jnp.float32)

    def step(t, h, c):
        xp_t = xp_ref[:, t, :]                           # [bb, 4H] precomputed
        gates = xp_t + jnp.dot(h, w_h, preferred_element_type=jnp.float32)
        # Gate columns were permuted at pack time to (i, f, o | g):
        #   one sigmoid pass over 3H lanes, one tanh pass over H lanes.
        sig = jax.nn.sigmoid(gates[:, :3 * H])
        g_g = jnp.tanh(gates[:, 3 * H:])
        i_g = sig[:, 0 * H:1 * H]
        f_g = sig[:, 1 * H:2 * H]
        o_g = sig[:, 2 * H:3 * H]
        c_new = f_g * c + i_g * g_g
        h_new = o_g * jnp.tanh(c_new)
        # pack_padded_sequence semantics: rows with length <= t keep their state.
        m = (t < lengths).astype(jnp.float32)            # [bb, 1], computed once, reused
        c = c + m * (c_new - c)
        h = h + m * (h_new - h)
        return h, c

    if T <= 8:
        # Tiny max-entity-size (typical MWEs): static unroll, static VMEM views.
        h, c = h0, c0
        for t in range(T):
            h, c = step(t, h, c)
    else:
        # Larger T: bounded-unroll fori_loop keeps vreg pressure / compile time sane.
        def body(t, carry):
            return step(t, *carry)
        h, c = jax.lax.fori_loop(0, T, body, (h0, c0), unroll=2)

    out = (jnp.dot(h, wll_ref[...], preferred_element_type=jnp.float32)
           + bll_ref[...].astype(jnp.float32))
    # NOTE: for real deployments pad embedding_dim / 4H to multiples of 128 so this
    # store (and the per-gate elementwise work) is lane-dense / unmasked.
    o_ref[...] = out.astype(o_ref.dtype)


def lstm_multiply(batch_mwe, mwe_lengths, params, *, max_block_b=256):
    """batch_mwe: [B, T, D]; mwe_lengths: [B] ints (valid words per row).
    params = (w_x[D,4H], w_h[H,4H], b_g[1,4H], w_ll[H,E], b_ll[1,E]),
    pre-transposed and with gate columns permuted to (i, f, o, g) -- see pack_params."""
    w_x, w_h, b_g, w_ll, b_ll = params
    B, T, D = batch_mwe.shape
    H = w_h.shape[0]
    G = 4 * H
    E = w_ll.shape[1]

    lens = mwe_lengths.astype(jnp.int32).reshape(B, 1)

    # Batch tile: at least 2 tiles when B permits (so dimension_semantics="parallel"
    # actually uses both v7x TensorCores), tile a multiple of 8 sublanes.
    if B <= 8:
        bb = B                                          # full-array block, layout-legal
    else:
        bb = min(max_block_b, _round_up(pl.cdiv(B, 2), 8))
    pad = (-B) % bb
    if pad:
        batch_mwe = jnp.pad(batch_mwe, ((0, pad), (0, 0), (0, 0)))
        lens = jnp.pad(lens, ((0, pad), (0, 0)))        # length 0 -> padded rows inert
    Bp = batch_mwe.shape[0]
    n_tiles = Bp // bb

    # VMEM budget: double-buffered x tile + 2x resident weights + xp scratch + output.
    itm_x = jnp.dtype(batch_mwe.dtype).itemsize
    weight_bytes = sum(int(p.size) * jnp.dtype(p.dtype).itemsize for p in params)
    vmem_est = (2 * bb * T * D * itm_x
                + 2 * weight_bytes
                + bb * T * G * 4
                + 2 * bb * E * itm_x
                + 2 * bb * 4)
    vmem_limit = int(min(64 * 2 ** 20, max(32 * 2 ** 20, 2 * vmem_est)))

    def _const(shape):
        return pl.BlockSpec(shape, lambda b, _s=len(shape): (0,) * _s)

    out = pl.pallas_call(
        _lstm_mwe_kernel,
        out_shape=jax.ShapeDtypeStruct((Bp, E), batch_mwe.dtype),
        grid_spec=pltpu.PrefetchScalarGridSpec(
            num_scalar_prefetch=0,
            grid=(n_tiles,),
            in_specs=[
                pl.BlockSpec((bb, 1), lambda b: (b, 0)),        # lengths
                pl.BlockSpec((bb, T, D), lambda b: (b, 0, 0)),  # batch_mwe tile
                _const((D, G)),                                 # W_ih^T (resident)
                _const((H, G)),                                 # W_hh^T (resident)
                _const((1, G)),                                 # b_ih + b_hh
                _const((H, E)),                                 # W_ll^T (resident)
                _const((1, E)),                                 # b_ll
            ],
            out_specs=pl.BlockSpec((bb, E), lambda b: (b, 0)),
            scratch_shapes=[pltpu.VMEM((bb, T, G), jnp.float32)],  # hoisted x-projection
        ),
        compiler_params=pltpu.CompilerParams(
            dimension_semantics=("parallel",),
            vmem_limit_bytes=vmem_limit,
        ),
    )(lens, batch_mwe, w_x, w_h, b_g, w_ll, b_ll)
    return out[:B]


# ----------------------------- parameter handling -----------------------------

def _init_torch_params(key, embedding_dim, hidden_size, dtype=jnp.float32):
    """PyTorch-layout parameters matching the module's init:
    LSTM weights [4H, D]/[4H, H] and ll.weight [E, H] xavier_normal_, all biases 0,
    gate order (i, f, g, o) along the 4H axis (PyTorch convention)."""
    D, H, E = embedding_dim, hidden_size, embedding_dim
    k1, k2, k3 = jax.random.split(key, 3)

    def xavier(k, shape):
        fan_out, fan_in = shape
        std = (2.0 / (fan_in + fan_out)) ** 0.5
        return std * jax.random.normal(k, shape, dtype)

    w_ih = xavier(k1, (4 * H, D))
    w_hh = xavier(k2, (4 * H, H))
    b_ih = jnp.zeros((4 * H,), dtype)
    b_hh = jnp.zeros((4 * H,), dtype)
    w_ll = xavier(k3, (E, H))
    b_ll = jnp.zeros((E,), dtype)
    return w_ih, w_hh, b_ih, b_hh, w_ll, b_ll


def pack_params(torch_params):
    """Convert PyTorch-layout params into the kernel's persistent layout:
    pre-transposed to [in, out], LSTM biases pre-summed, and gate columns permuted
    from PyTorch (i, f, g, o) to (i, f, o, g) so the kernel fuses activations."""
    w_ih, w_hh, b_ih, b_hh, w_ll, b_ll = torch_params

    def perm_gates(w):
        i, f, g, o = jnp.split(w, 4, axis=0)
        return jnp.concatenate([i, f, o, g], axis=0)

    w_x = perm_gates(w_ih).T                       # [D, 4H]
    w_h = perm_gates(w_hh).T                       # [H, 4H]
    b_g = perm_gates(b_ih + b_hh).reshape(1, -1)   # [1, 4H]
    return w_x, w_h, b_g, w_ll.T, b_ll.reshape(1, -1)


# --------------------------------- reference ----------------------------------

def _reference(batch_mwe, mwe_lengths, torch_params):
    """Plain-JAX replica of the PyTorch forward, using PyTorch layout & gate order
    directly (independently checks the transpose / gate-permutation / bias-summing)."""
    w_ih, w_hh, b_ih, b_hh, w_ll, b_ll = torch_params
    B, T, _ = batch_mwe.shape
    H = w_hh.shape[1]
    lens = mwe_lengths.astype(jnp.int32)[:, None]
    h = jnp.zeros((B, H), jnp.float32)
    c = jnp.zeros((B, H), jnp.float32)
    for t in range(T):
        x_t = batch_mwe[:, t, :].astype(jnp.float32)
        gates = x_t @ w_ih.T + h @ w_hh.T + b_ih + b_hh
        i_g = jax.nn.sigmoid(gates[:, 0 * H:1 * H])
        f_g = jax.nn.sigmoid(gates[:, 1 * H:2 * H])
        g_g = jnp.tanh(gates[:, 2 * H:3 * H])
        o_g = jax.nn.sigmoid(gates[:, 3 * H:4 * H])
        c_new = f_g * c + i_g * g_g
        h_new = o_g * jnp.tanh(c_new)
        valid = t < lens
        c = jnp.where(valid, c_new, c)
        h = jnp.where(valid, h_new, h)
    return (h @ w_ll.T + b_ll).astype(batch_mwe.dtype)


if __name__ == "__main__":
    key = jax.random.PRNGKey(0)
    B, T, D, H = 2, 4, 32, 32     # batch, max entity size, embedding_dim, hidden_size

    k_x, k_p = jax.random.split(key)
    batch_mwe = jax.random.normal(k_x, (B, T, D), jnp.float32)
    mwe_lengths = jnp.array([4, 2], jnp.int32)   # descending, as pack_padded_sequence expects

    torch_params = _init_torch_params(k_p, D, H)
    params = pack_params(torch_params)

    out = lstm_multiply(batch_mwe, mwe_lengths, params)
    out = jax.block_until_ready(out)

    ref = _reference(batch_mwe, mwe_lengths, torch_params)
    assert out.shape == (B, D)
    max_err = float(jnp.max(jnp.abs(out - ref)))
    assert jnp.allclose(out, ref, rtol=1e-4, atol=1e-5), max_err

    print("KERNEL_OK")
</pallas_src>

<mosaic_0001>
module attributes {stable_mosaic.version = 11 : i64} {
  func.func @_lstm_mwe_kernel(%arg0: i32, %arg1: memref<2x1xi32, #tpu.memory_space<vmem>>, %arg2: memref<2x4x32xf32, #tpu.memory_space<vmem>>, %arg3: memref<32x128xf32, #tpu.memory_space<vmem>>, %arg4: memref<32x128xf32, #tpu.memory_space<vmem>>, %arg5: memref<1x128xf32, #tpu.memory_space<vmem>>, %arg6: memref<32x32xf32, #tpu.memory_space<vmem>>, %arg7: memref<1x32xf32, #tpu.memory_space<vmem>>, %arg8: memref<2x32xf32, #tpu.memory_space<vmem>>, %arg9: memref<2x4x128xf32, #tpu.memory_space<vmem>>) attributes {dimension_semantics = [#tpu.dimension_semantics<parallel>], iteration_bounds = array<i64: 1>, scalar_prefetch = 0 : i64, scratch_operands = 1 : i64, tpu.core_type = #tpu.core_type<tc>, window_params = [{transform_indices = @transform_0, window_bounds = array<i64: 2, 1>}, {transform_indices = @transform_1, window_bounds = array<i64: 2, 4, 32>}, {pipeline_mode = #tpu.pipeline_mode<synchronous>, transform_indices = @transform_2, window_bounds = array<i64: 32, 128>}, {pipeline_mode = #tpu.pipeline_mode<synchronous>, transform_indices = @transform_3, window_bounds = array<i64: 32, 128>}, {pipeline_mode = #tpu.pipeline_mode<synchronous>, transform_indices = @transform_4, window_bounds = array<i64: 1, 128>}, {pipeline_mode = #tpu.pipeline_mode<synchronous>, transform_indices = @transform_5, window_bounds = array<i64: 32, 32>}, {pipeline_mode = #tpu.pipeline_mode<synchronous>, transform_indices = @transform_6, window_bounds = array<i64: 1, 32>}, {transform_indices = @transform_7, window_bounds = array<i64: 2, 32>}]} {
    %c0 = arith.constant 0 : index
    %c0_0 = arith.constant 0 : index
    %0 = vector.load %arg1[%c0, %c0_0] : memref<2x1xi32, #tpu.memory_space<vmem>>, vector<2x1xi32>
    %c0_1 = arith.constant 0 : index
    %c0_2 = arith.constant 0 : index
    %1 = vector.load %arg4[%c0_1, %c0_2] : memref<32x128xf32, #tpu.memory_space<vmem>>, vector<32x128xf32>
    %c0_3 = arith.constant 0 : index
    %c0_4 = arith.constant 0 : index
    %c0_5 = arith.constant 0 : index
    %2 = vector.load %arg2[%c0_3, %c0_4, %c0_5] : memref<2x4x32xf32, #tpu.memory_space<vmem>>, vector<2x4x32xf32>
    %3 = vector.shape_cast %2 : vector<2x4x32xf32> to vector<8x32xf32>
    %c0_6 = arith.constant 0 : index
    %c0_7 = arith.constant 0 : index
    %4 = vector.load %arg3[%c0_6, %c0_7] : memref<32x128xf32, #tpu.memory_space<vmem>>, vector<32x128xf32>
    %cst = arith.constant dense<0.000000e+00> : vector<8x128xf32>
    %5 = tpu.matmul %3, %4, %cst {dimension_numbers = #tpu.dot_dimension_numbers<[1], [0], [0], [1], [0, 0, 1, 1], [], []>} : vector<8x32xf32>, vector<32x128xf32>, vector<8x128xf32> -> vector<8x128xf32>
    %c0_8 = arith.constant 0 : index
    %c0_9 = arith.constant 0 : index
    %6 = vector.load %arg5[%c0_8, %c0_9] : memref<1x128xf32, #tpu.memory_space<vmem>>, vector<1x128xf32>
    %7 = vector.broadcast %6 : vector<1x128xf32> to vector<8x128xf32>
    %8 = arith.addf %5, %7 : vector<8x128xf32>
    %9 = vector.shape_cast %8 : vector<8x128xf32> to vector<2x4x128xf32>
    %c0_10 = arith.constant 0 : index
    %c0_11 = arith.constant 0 : index
    %c0_12 = arith.constant 0 : index
    %10 = vector.load %arg9[%c0_10, %c0_11, %c0_12] : memref<2x4x128xf32, #tpu.memory_space<vmem>>, vector<2x4x128xf32>
    tpu.vector_store %arg9[%c0_10, %c0_11, %c0_12], %9 {strides = array<i32>} : memref<2x4x128xf32, #tpu.memory_space<vmem>>, vector<2x4x128xf32>,
    %cst_13 = arith.constant 0.000000e+00 : f32
    %11 = vector.broadcast %cst_13 : f32 to vector<2x32xf32>
    %cst_14 = arith.constant 0.000000e+00 : f32
    %12 = vector.broadcast %cst_14 : f32 to vector<2x32xf32>
    %c0_15 = arith.constant 0 : index
    %c0_16 = arith.constant 0 : index
    %c0_17 = arith.constant 0 : index
    %13 = vector.load %arg9[%c0_15, %c0_16, %c0_17] : memref<2x4x128xf32, #tpu.memory_space<vmem>>, vector<2x1x128xf32>
    %14 = vector.shape_cast %13 : vector<2x1x128xf32> to vector<2x128xf32>
    %cst_18 = arith.constant dense<0.000000e+00> : vector<2x128xf32>
    %15 = tpu.matmul %11, %1, %cst_18 {dimension_numbers = #tpu.dot_dimension_numbers<[1], [0], [0], [1], [0, 0, 1, 1], [], []>} : vector<2x32xf32>, vector<32x128xf32>, vector<2x128xf32> -> vector<2x128xf32>
    %16 = arith.addf %14, %15 : vector<2x128xf32>
    %17 = vector.extract_strided_slice %16 {offsets = [0, 0], sizes = [2, 96], strides = [1, 1]} : vector<2x128xf32> to vector<2x96xf32>
    %18 = arith.negf %17 : vector<2x96xf32>
    %19 = math.exp %18 : vector<2x96xf32>
    %cst_19 = arith.constant 1.000000e+00 : f32
    %20 = vector.broadcast %cst_19 : f32 to vector<2x96xf32>
    %21 = arith.addf %20, %19 : vector<2x96xf32>
    %22 = arith.divf %20, %21 : vector<2x96xf32>
    %23 = vector.extract_strided_slice %16 {offsets = [0, 96], sizes = [2, 32], strides = [1, 1]} : vector<2x128xf32> to vector<2x32xf32>
    %24 = math.tanh %23 : vector<2x32xf32>
    %25 = vector.extract_strided_slice %22 {offsets = [0, 0], sizes = [2, 32], strides = [1, 1]} : vector<2x96xf32> to vector<2x32xf32>
    %26 = vector.extract_strided_slice %22 {offsets = [0, 32], sizes = [2, 32], strides = [1, 1]} : vector<2x96xf32> to vector<2x32xf32>
    %27 = vector.extract_strided_slice %22 {offsets = [0, 64], sizes = [2, 32], strides = [1, 1]} : vector<2x96xf32> to vector<2x32xf32>
    %28 = arith.mulf %26, %12 : vector<2x32xf32>
    %29 = arith.mulf %25, %24 : vector<2x32xf32>
    %30 = arith.addf %28, %29 : vector<2x32xf32>
    %31 = math.tanh %30 : vector<2x32xf32>
    %32 = arith.mulf %27, %31 : vector<2x32xf32>
    %c0_i32 = arith.constant 0 : i32
    %33 = vector.broadcast %c0_i32 : i32 to vector<2x1xi32>
    %34 = arith.cmpi sgt, %0, %33 : vector<2x1xi32>
    %35 = arith.extui %34 : vector<2x1xi1> to vector<2x1xi32>
    %36 = arith.sitofp %35 : vector<2x1xi32> to vector<2x1xf32>
    %37 = arith.subf %30, %12 : vector<2x32xf32>
    %38 = vector.broadcast %36 : vector<2x1xf32> to vector<2x32xf32>
    %39 = arith.mulf %38, %37 : vector<2x32xf32>
    %40 = arith.addf %12, %39 : vector<2x32xf32>
    %41 = arith.subf %32, %11 : vector<2x32xf32>
    %42 = vector.broadcast %36 : vector<2x1xf32> to vector<2x32xf32>
    %43 = arith.mulf %42, %41 : vector<2x32xf32>
    %44 = arith.addf %11, %43 : vector<2x32xf32>
    %c0_20 = arith.constant 0 : index
    %c1 = arith.constant 1 : index
    %c0_21 = arith.constant 0 : index
    %45 = vector.load %arg9[%c0_20, %c1, %c0_21] : memref<2x4x128xf32, #tpu.memory_space<vmem>>, vector<2x1x128xf32>
    %46 = vector.shape_cast %45 : vector<2x1x128xf32> to vector<2x128xf32>
    %cst_22 = arith.constant dense<0.000000e+00> : vector<2x128xf32>
    %47 = tpu.matmul %44, %1, %cst_22 {dimension_numbers = #tpu.dot_dimension_numbers<[1], [0], [0], [1], [0, 0, 1, 1], [], []>} : vector<2x32xf32>, vector<32x128xf32>, vector<2x128xf32> -> vector<2x128xf32>
    %48 = arith.addf %46, %47 : vector<2x128xf32>
    %49 = vector.extract_strided_slice %48 {offsets = [0, 0], sizes = [2, 96], strides = [1, 1]} : vector<2x128xf32> to vector<2x96xf32>
    %50 = arith.negf %49 : vector<2x96xf32>
    %51 = math.exp %50 : vector<2x96xf32>
    %cst_23 = arith.constant 1.000000e+00 : f32
    %52 = vector.broadcast %cst_23 : f32 to vector<2x96xf32>
    %53 = arith.addf %52, %51 : vector<2x96xf32>
    %54 = arith.divf %52, %53 : vector<2x96xf32>
    %55 = vector.extract_strided_slice %48 {offsets = [0, 96], sizes = [2, 32], strides = [1, 1]} : vector<2x128xf32> to vector<2x32xf32>
    %56 = math.tanh %55 : vector<2x32xf32>
    %57 = vector.extract_strided_slice %54 {offsets = [0, 0], sizes = [2, 32], strides = [1, 1]} : vector<2x96xf32> to vector<2x32xf32>
    %58 = vector.extract_strided_slice %54 {offsets = [0, 32], sizes = [2, 32], strides = [1, 1]} : vector<2x96xf32> to vector<2x32xf32>
    %59 = vector.extract_strided_slice %54 {offsets = [0, 64], sizes = [2, 32], strides = [1, 1]} : vector<2x96xf32> to vector<2x32xf32>
    %60 = arith.mulf %58, %40 : vector<2x32xf32>
    %61 = arith.mulf %57, %56 : vector<2x32xf32>
    %62 = arith.addf %60, %61 : vector<2x32xf32>
    %63 = math.tanh %62 : vector<2x32xf32>
    %64 = arith.mulf %59, %63 : vector<2x32xf32>
    %c1_i32 = arith.constant 1 : i32
    %65 = vector.broadcast %c1_i32 : i32 to vector<2x1xi32>
    %66 = arith.cmpi sgt, %0, %65 : vector<2x1xi32>
    %67 = arith.extui %66 : vector<2x1xi1> to vector<2x1xi32>
    %68 = arith.sitofp %67 : vector<2x1xi32> to vector<2x1xf32>
    %69 = arith.subf %62, %40 : vector<2x32xf32>
    %70 = vector.broadcast %68 : vector<2x1xf32> to vector<2x32xf32>
    %71 = arith.mulf %70, %69 : vector<2x32xf32>
    %72 = arith.addf %40, %71 : vector<2x32xf32>
    %73 = arith.subf %64, %44 : vector<2x32xf32>
    %74 = vector.broadcast %68 : vector<2x1xf32> to vector<2x32xf32>
    %75 = arith.mulf %74, %73 : vector<2x32xf32>
    %76 = arith.addf %44, %75 : vector<2x32xf32>
    %c0_24 = arith.constant 0 : index
    %c2 = arith.constant 2 : index
    %c0_25 = arith.constant 0 : index
    %77 = vector.load %arg9[%c0_24, %c2, %c0_25] : memref<2x4x128xf32, #tpu.memory_space<vmem>>, vector<2x1x128xf32>
    %78 = vector.shape_cast %77 : vector<2x1x128xf32> to vector<2x128xf32>
    %cst_26 = arith.constant dense<0.000000e+00> : vector<2x128xf32>
    %79 = tpu.matmul %76, %1, %cst_26 {dimension_numbers = #tpu.dot_dimension_numbers<[1], [0], [0], [1], [0, 0, 1, 1], [], []>} : vector<2x32xf32>, vector<32x128xf32>, vector<2x128xf32> -> vector<2x128xf32>
    %80 = arith.addf %78, %79 : vector<2x128xf32>
    %81 = vector.extract_strided_slice %80 {offsets = [0, 0], sizes = [2, 96], strides = [1, 1]} : vector<2x128xf32> to vector<2x96xf32>
    %82 = arith.negf %81 : vector<2x96xf32>
    %83 = math.exp %82 : vector<2x96xf32>
    %cst_27 = arith.constant 1.000000e+00 : f32
    %84 = vector.broadcast %cst_27 : f32 to vector<2x96xf32>
    %85 = arith.addf %84, %83 : vector<2x96xf32>
    %86 = arith.divf %84, %85 : vector<2x96xf32>
    %87 = vector.extract_strided_slice %80 {offsets = [0, 96], sizes = [2, 32], strides = [1, 1]} : vector<2x128xf32> to vector<2x32xf32>
    %88 = math.tanh %87 : vector<2x32xf32>
    %89 = vector.extract_strided_slice %86 {offsets = [0, 0], sizes = [2, 32], strides = [1, 1]} : vector<2x96xf32> to vector<2x32xf32>
    %90 = vector.extract_strided_slice %86 {offsets = [0, 32], sizes = [2, 32], strides = [1, 1]} : vector<2x96xf32> to vector<2x32xf32>
    %91 = vector.extract_strided_slice %86 {offsets = [0, 64], sizes = [2, 32], strides = [1, 1]} : vector<2x96xf32> to vector<2x32xf32>
    %92 = arith.mulf %90, %72 : vector<2x32xf32>
    %93 = arith.mulf %89, %88 : vector<2x32xf32>
    %94 = arith.addf %92, %93 : vector<2x32xf32>
    %95 = math.tanh %94 : vector<2x32xf32>
    %96 = arith.mulf %91, %95 : vector<2x32xf32>
    %c2_i32 = arith.constant 2 : i32
    %97 = vector.broadcast %c2_i32 : i32 to vector<2x1xi32>
    %98 = arith.cmpi sgt, %0, %97 : vector<2x1xi32>
    %99 = arith.extui %98 : vector<2x1xi1> to vector<2x1xi32>
    %100 = arith.sitofp %99 : vector<2x1xi32> to vector<2x1xf32>
    %101 = arith.subf %94, %72 : vector<2x32xf32>
    %102 = vector.broadcast %100 : vector<2x1xf32> to vector<2x32xf32>
    %103 = arith.mulf %102, %101 : vector<2x32xf32>
    %104 = arith.addf %72, %103 : vector<2x32xf32>
    %105 = arith.subf %96, %76 : vector<2x32xf32>
    %106 = vector.broadcast %100 : vector<2x1xf32> to vector<2x32xf32>
    %107 = arith.mulf %106, %105 : vector<2x32xf32>
    %108 = arith.addf %76, %107 : vector<2x32xf32>
    %c0_28 = arith.constant 0 : index
    %c3 = arith.constant 3 : index
    %c0_29 = arith.constant 0 : index
    %109 = vector.load %arg9[%c0_28, %c3, %c0_29] : memref<2x4x128xf32, #tpu.memory_space<vmem>>, vector<2x1x128xf32>
    %110 = vector.shape_cast %109 : vector<2x1x128xf32> to vector<2x128xf32>
    %cst_30 = arith.constant dense<0.000000e+00> : vector<2x128xf32>
    %111 = tpu.matmul %108, %1, %cst_30 {dimension_numbers = #tpu.dot_dimension_numbers<[1], [0], [0], [1], [0, 0, 1, 1], [], []>} : vector<2x32xf32>, vector<32x128xf32>, vector<2x128xf32> -> vector<2x128xf32>
    %112 = arith.addf %110, %111 : vector<2x128xf32>
    %113 = vector.extract_strided_slice %112 {offsets = [0, 0], sizes = [2, 96], strides = [1, 1]} : vector<2x128xf32> to vector<2x96xf32>
    %114 = arith.negf %113 : vector<2x96xf32>
    %115 = math.exp %114 : vector<2x96xf32>
    %cst_31 = arith.constant 1.000000e+00 : f32
    %116 = vector.broadcast %cst_31 : f32 to vector<2x96xf32>
    %117 = arith.addf %116, %115 : vector<2x96xf32>
    %118 = arith.divf %116, %117 : vector<2x96xf32>
    %119 = vector.extract_strided_slice %112 {offsets = [0, 96], sizes = [2, 32], strides = [1, 1]} : vector<2x128xf32> to vector<2x32xf32>
    %120 = math.tanh %119 : vector<2x32xf32>
    %121 = vector.extract_strided_slice %118 {offsets = [0, 0], sizes = [2, 32], strides = [1, 1]} : vector<2x96xf32> to vector<2x32xf32>
    %122 = vector.extract_strided_slice %118 {offsets = [0, 32], sizes = [2, 32], strides = [1, 1]} : vector<2x96xf32> to vector<2x32xf32>
    %123 = vector.extract_strided_slice %118 {offsets = [0, 64], sizes = [2, 32], strides = [1, 1]} : vector<2x96xf32> to vector<2x32xf32>
    %124 = arith.mulf %122, %104 : vector<2x32xf32>
    %125 = arith.mulf %121, %120 : vector<2x32xf32>
    %126 = arith.addf %124, %125 : vector<2x32xf32>
    %127 = math.tanh %126 : vector<2x32xf32>
    %128 = arith.mulf %123, %127 : vector<2x32xf32>
    %c3_i32 = arith.constant 3 : i32
    %129 = vector.broadcast %c3_i32 : i32 to vector<2x1xi32>
    %130 = arith.cmpi sgt, %0, %129 : vector<2x1xi32>
    %131 = arith.extui %130 : vector<2x1xi1> to vector<2x1xi32>
    %132 = arith.sitofp %131 : vector<2x1xi32> to vector<2x1xf32>
    %133 = arith.subf %128, %108 : vector<2x32xf32>
    %134 = vector.broadcast %132 : vector<2x1xf32> to vector<2x32xf32>
    %135 = arith.mulf %134, %133 : vector<2x32xf32>
    %136 = arith.addf %108, %135 : vector<2x32xf32>
    %c0_32 = arith.constant 0 : index
    %c0_33 = arith.constant 0 : index
    %137 = vector.load %arg6[%c0_32, %c0_33] : memref<32x32xf32, #tpu.memory_space<vmem>>, vector<32x32xf32>
    %cst_34 = arith.constant dense<0.000000e+00> : vector<2x32xf32>
    %138 = tpu.matmul %136, %137, %cst_34 {dimension_numbers = #tpu.dot_dimension_numbers<[1], [0], [0], [1], [0, 0, 1, 1], [], []>} : vector<2x32xf32>, vector<32x32xf32>, vector<2x32xf32> -> vector<2x32xf32>
    %c0_35 = arith.constant 0 : index
    %c0_36 = arith.constant 0 : index
    %139 = vector.load %arg7[%c0_35, %c0_36] : memref<1x32xf32, #tpu.memory_space<vmem>>, vector<1x32xf32>
    %140 = vector.broadcast %139 : vector<1x32xf32> to vector<2x32xf32>
    %141 = arith.addf %138, %140 : vector<2x32xf32>
    %c0_37 = arith.constant 0 : index
    %c0_38 = arith.constant 0 : index
    %142 = vector.load %arg8[%c0_37, %c0_38] : memref<2x32xf32, #tpu.memory_space<vmem>>, vector<2x32xf32>
    tpu.vector_store %arg8[%c0_37, %c0_38], %141 {strides = array<i32>} : memref<2x32xf32, #tpu.memory_space<vmem>>, vector<2x32xf32>,
    return
  }
  func.func @transform_0(%arg0: i32) -> (i32, i32) {
    %c0_i32 = arith.constant 0 : i32
    %c0_i32_0 = arith.constant 0 : i32
    return %arg0, %c0_i32 : i32, i32
  }
  func.func @transform_1(%arg0: i32) -> (i32, i32, i32) {
    %c0_i32 = arith.constant 0 : i32
    %c0_i32_0 = arith.constant 0 : i32
    %c0_i32_1 = arith.constant 0 : i32
    return %arg0, %c0_i32, %c0_i32_0 : i32, i32, i32
  }
  func.func @transform_2(%arg0: i32) -> (i32, i32) {
    %c0_i32 = arith.constant 0 : i32
    %c0_i32_0 = arith.constant 0 : i32
    %c0_i32_1 = arith.constant 0 : i32
    return %c0_i32, %c0_i32_0 : i32, i32
  }
  func.func @transform_3(%arg0: i32) -> (i32, i32) {
    %c0_i32 = arith.constant 0 : i32
    %c0_i32_0 = arith.constant 0 : i32
    %c0_i32_1 = arith.constant 0 : i32
    return %c0_i32, %c0_i32_0 : i32, i32
  }
  func.func @transform_4(%arg0: i32) -> (i32, i32) {
    %c0_i32 = arith.constant 0 : i32
    %c0_i32_0 = arith.constant 0 : i32
    %c0_i32_1 = arith.constant 0 : i32
    return %c0_i32, %c0_i32_0 : i32, i32
  }
  func.func @transform_5(%arg0: i32) -> (i32, i32) {
    %c0_i32 = arith.constant 0 : i32
    %c0_i32_0 = arith.constant 0 : i32
    %c0_i32_1 = arith.constant 0 : i32
    return %c0_i32, %c0_i32_0 : i32, i32
  }
  func.func @transform_6(%arg0: i32) -> (i32, i32) {
    %c0_i32 = arith.constant 0 : i32
    %c0_i32_0 = arith.constant 0 : i32
    %c0_i32_1 = arith.constant 0 : i32
    return %c0_i32, %c0_i32_0 : i32, i32
  }
  func.func @transform_7(%arg0: i32) -> (i32, i32) {
    %c0_i32 = arith.constant 0 : i32
    %c0_i32_0 = arith.constant 0 : i32
    return %arg0, %c0_i32 : i32, i32
  }
}

</mosaic_0001>

<llo_original>
// kernel: tpu_custom_call.1
$region0: #{tpu_custom_call.1}
  #allocation0 [shape = 'u32[]', space=smem, size = 0x4, offset = 0x4, fixed_abs, tag = 'smem constant byte address 0x4 - core index']
  #allocation1 [shape = 'u32[144,128]{1,0:T(1,128)}', space=vmem, size = 0x12000, scoped, tag = 'internal scratch']
  #allocation2 [shape = 'f32[2,4,128]{2,1,0:T(4,128)}', space=vmem, size = 0x1000, scoped, tag = 'scratch operand']
  %s0 = inlined_call_operand.vmem [shape: s32[2,1], index: 0, kind: input, shape index: {}]
  %s1 = inlined_call_operand.hbm [shape: f32[2,4,32], index: 1, kind: input, shape index: {}]
  %s2 = inlined_call_operand.hbm [shape: f32[32,128], index: 2, kind: input, shape index: {}]
  %s3 = inlined_call_operand.hbm [shape: f32[32,128], index: 3, kind: input, shape index: {}]
  %s4 = inlined_call_operand.vmem [shape: f32[1,128], index: 4, kind: input, shape index: {}]
  %s5 = inlined_call_operand.hbm [shape: f32[32,32], index: 5, kind: input, shape index: {}]
  %s6 = inlined_call_operand.vmem [shape: f32[1,32], index: 6, kind: input, shape index: {}]
  %s7 = inlined_call_operand.hbm [shape: f32[2,32], index: 7, kind: output, shape index: {}]
  %s8 = sld [smem:[#allocation0]]
  $region54: #{tpu_custom_call.1} parent=0
    _
  %s10 = ssub.s32 1, %s8
  %s11 = scalar_select 0, %s10, %s8
  $region1: #{tpu_custom_call.1} parent=0
    #allocation3 [shape = 'u8[4096]{0}', space=vmem, size = 0x1000, scoped, tag = 'input window, operand 1, single buffered']
    #allocation4 [shape = 's32[1]{0}', space=sflag, size = 0x4, scoped, tag = 'scoped memory for tpu_custom_call.1']
    #allocation5 [shape = 's32[1]{0}', space=sflag, size = 0x4, scoped, tag = 'scoped memory for tpu_custom_call.1']
    #allocation6 [shape = 'u8[16384]{0}', space=vmem, size = 0x4000, scoped, tag = 'input window, operand 2, single buffered']
    #allocation7 [shape = 's32[1]{0}', space=sflag, size = 0x4, scoped, tag = 'scoped memory for tpu_custom_call.1']
    #allocation8 [shape = 'u8[16384]{0}', space=vmem, size = 0x4000, scoped, tag = 'input window, operand 3, single buffered']
    #allocation9 [shape = 'u8[16384]{0}', space=vmem, size = 0x4000, scoped, tag = 'input window, operand 5, single buffered']
    #allocation10 [shape = 's32[1]{0}', space=sflag, size = 0x4, scoped, tag = 'scoped memory for tpu_custom_call.1']
    #allocation11 [shape = 'u8[1024]{0}', space=vmem, size = 0x400, scoped, tag = 'output window, operand 0, single buffered']
    %12 = vsyncpa [#allocation4], 0
    %13 = vsyncpa [#allocation7], 0
    %14 = vsyncpa [#allocation10], 0
    %15 = vsyncpa [#allocation5], 0
    // Predicated region
    $region2: #{tpu_custom_call.1} parent=1 // pred_check
      _
    $region3: #{tpu_custom_call.1} parent=1 // pred_check_branch
      %17 = sbr.rel (0) target = $region5
    $region4: #{tpu_custom_call.1} parent=1 // pred_region
      _
    $region5: #{tpu_custom_call.1} parent=1 // pred_fallthru
      _
    // Predicated region
    $region6: #{tpu_custom_call.1} parent=1 // pred_check
      _
    $region7: #{tpu_custom_call.1} parent=1 // pred_check_branch
      %19 = sbr.rel (0) target = $region9
    $region8: #{tpu_custom_call.1} parent=1 // pred_region
      %s21 = ssub.s32 128, 128
      %22 = vsyncadd [#allocation4], %s21
      %s23 = sshll.u32 [#allocation3], 4
      %s24 = int_to_ptr.vmem [resolvable:$true] %s23
      %29 = dma.hbm_to_vmem [thread:$0]  %s1, 128, %s24, [#allocation4], 64, 64, 4
    $region9: #{tpu_custom_call.1} parent=1 // pred_fallthru
      _
    // Predicated region
    $region10: #{tpu_custom_call.1} parent=1 // pred_check
      _
    $region11: #{tpu_custom_call.1} parent=1 // pred_check_branch
      %31 = sbr.rel (0) target = $region13
    $region12: #{tpu_custom_call.1} parent=1 // pred_region
      %s33 = ssub.s32 512, 512
      %34 = vsyncadd [#allocation7], %s33
      %s35 = sshll.u32 [#allocation6], 4
      %s36 = int_to_ptr.vmem [resolvable:$true] %s35
      %41 = dma.hbm_to_vmem [thread:$0]  %s2, 512, %s36, [#allocation7], 128, 128, 8
    $region13: #{tpu_custom_call.1} parent=1 // pred_fallthru
      _
    // Predicated region
    $region14: #{tpu_custom_call.1} parent=1 // pred_check
      _
    $region15: #{tpu_custom_call.1} parent=1 // pred_check_branch
      %43 = sbr.rel (0) target = $region17
    $region16: #{tpu_custom_call.1} parent=1 // pred_region
      %s45 = ssub.s32 512, 512
      %46 = vsyncadd [#allocation7], %s45
      %s47 = sshll.u32 [#allocation8], 4
      %s48 = int_to_ptr.vmem [resolvable:$true] %s47
      %53 = dma.hbm_to_vmem [thread:$0]  %s3, 512, %s48, [#allocation7], 128, 128, 8
    $region17: #{tpu_custom_call.1} parent=1 // pred_fallthru
      _
    // Predicated region
    $region18: #{tpu_custom_call.1} parent=1 // pred_check
      _
    $region19: #{tpu_custom_call.1} parent=1 // pred_check_branch
      %55 = sbr.rel (0) target = $region21
    $region20: #{tpu_custom_call.1} parent=1 // pred_region
      _
    $region21: #{tpu_custom_call.1} parent=1 // pred_fallthru
      _
    // Predicated region
    $region22: #{tpu_custom_call.1} parent=1 // pred_check
      _
    $region23: #{tpu_custom_call.1} parent=1 // pred_check_branch
      %57 = sbr.rel (0) target = $region25
    $region24: #{tpu_custom_call.1} parent=1 // pred_region
      %s59 = ssub.s32 512, 512
      %60 = vsyncadd [#allocation10], %s59
      %s61 = sshll.u32 [#allocation9], 4
      %s62 = int_to_ptr.vmem [resolvable:$true] %s61
      %67 = dma.hbm_to_vmem [thread:$0]  %s5, 512, %s62, [#allocation10], 128, 128, 8
    $region25: #{tpu_custom_call.1} parent=1 // pred_fallthru
      _
    // Predicated region
    $region26: #{tpu_custom_call.1} parent=1 // pred_check
      _
    $region27: #{tpu_custom_call.1} parent=1 // pred_check_branch
      %69 = sbr.rel (0) target = $region29
    $region28: #{tpu_custom_call.1} parent=1 // pred_region
      _
    $region29: #{tpu_custom_call.1} parent=1 // pred_fallthru
      _
    // Predicated region
    $region30: #{tpu_custom_call.1} parent=1 // pred_check
      _
    $region31: #{tpu_custom_call.1} parent=1 // pred_check_branch
      %71 = sbr.rel (0) target = $region33
    $region32: #{tpu_custom_call.1} parent=1 // pred_region
      %72 = dma.done [#allocation4], 128
    $region33: #{tpu_custom_call.1} parent=1 // pred_fallthru
      _
    // Predicated region
    $region34: #{tpu_custom_call.1} parent=1 // pred_check
      _
    $region35: #{tpu_custom_call.1} parent=1 // pred_check_branch
      %74 = sbr.rel (0) target = $region37
    $region36: #{tpu_custom_call.1} parent=1 // pred_region
      %75 = dma.done [#allocation7], 512
    $region37: #{tpu_custom_call.1} parent=1 // pred_fallthru
      _
    // Predicated region
    $region38: #{tpu_custom_call.1} parent=1 // pred_check
      _
    $region39: #{tpu_custom_call.1} parent=1 // pred_check_branch
      %77 = sbr.rel (0) target = $region41
    $region40: #{tpu_custom_call.1} parent=1 // pred_region
      %78 = dma.done [#allocation7], 512
    $region41: #{tpu_custom_call.1} parent=1 // pred_fallthru
      _
    // Predicated region
    $region42: #{tpu_custom_call.1} parent=1 // pred_check
      _
    $region43: #{tpu_custom_call.1} parent=1 // pred_check_branch
      %80 = sbr.rel (0) target = $region45
    $region44: #{tpu_custom_call.1} parent=1 // pred_region
      %81 = dma.done [#allocation10], 512
    $region45: #{tpu_custom_call.1} parent=1 // pred_fallthru
      _
    %v82 = vld [vmem:[%s0] sm:$0x3]
    %v83 = vld [vmem:[#allocation8] sm:$0xff]
    %v84 = vld [vmem:[#allocation8 + $0x8] sm:$0xff]
    %v85 = vld [vmem:[#allocation8 + $0x10] sm:$0xff]
    %v86 = vld [vmem:[#allocation8 + $0x18] sm:$0xff]
    %v87 = vld [vmem:[#allocation3] sm:$0xf]
    %v88 = vld [vmem:[#allocation3 + $0x4] sm:$0xf]
    %v89 = vld [vmem:[#allocation6] sm:$0xff]
    %v90 = vld [vmem:[#allocation6 + $0x8] sm:$0xff]
    %v91 = vld [vmem:[#allocation6 + $0x10] sm:$0xff]
    %v92 = vld [vmem:[#allocation6 + $0x18] sm:$0xff]
    %v93 = vld [vmem:[%s4] sm:$0x1]
    %v95 = vlaneseq
    %v96 = vshrl.u32 %v95, 7
    %v97 = vsub.s32 0, %v96
    %v98 = vrot.slane %v93, %v97
    %v102 = vcombine.low %v87, %v88
    %vm103 = vcmask 261120
    %v104 = vsel %vm103, %v102, 0
    %106 = vmatprep.subr.mxu0 0.0
    %107 = vmatpush1.msra.mxu0 %v89
    %108 = vmatprep.subr.mxu0 0.0
    %109 = vmatpush1.msra.mxu0 %v90
    %110 = vmatprep.subr.mxu0 0.0
    %111 = vmatpush1.msra.mxu0 %v91
    %112 = vmatprep.subr.mxu0 0.0
    %113 = vmatpush1.msra.mxu0 %v92
    %114 = vmatprep.subr.mxu0 0.0
    %115 = vmatpush1.msra.mxu0 0.0
    %116 = vmatprep.subr.mxu0 0.0
    %117 = vmatpush1.msra.mxu0 0.0
    %118 = vmatprep.subr.mxu0 0.0
    %119 = vmatpush1.msra.mxu0 0.0
    %120 = vmatprep.subr.mxu0 0.0
    %121 = vmatpush1.msra.mxu0 0.0
    %122 = vmatprep.subr.mxu0 0.0
    %123 = vmatpush1.msra.mxu0 0.0
    %124 = vmatprep.subr.mxu0 0.0
    %125 = vmatpush1.msra.mxu0 0.0
    %126 = vmatprep.subr.mxu0 0.0
    %127 = vmatpush1.msra.mxu0 0.0
    %128 = vmatprep.subr.mxu0 0.0
    %129 = vmatpush1.msra.mxu0 0.0
    %130 = vmatprep.subr.mxu0 0.0
    %131 = vmatpush1.msra.mxu0 0.0
    %132 = vmatprep.subr.mxu0 0.0
    %133 = vmatpush1.msra.mxu0 0.0
    %134 = vmatprep.subr.mxu0 0.0
    %135 = vmatpush1.msra.mxu0 0.0
    %136 = vmatprep.subr.mxu0 0.0
    %137 = vmatpush1.msra.mxu0 0.0
    %138 = vmatprep.subr.mxu0 0.0
    %139 = vmatpush1.msra.mxu0 0.0
    %140 = vmatprep.subr.mxu0 0.0
    %141 = vmatpush1.msra.mxu0 0.0
    %142 = vmatprep.subr.mxu0 0.0
    %143 = vmatpush1.msra.mxu0 0.0
    %144 = vmatprep.subr.mxu0 0.0
    %145 = vmatpush1.msra.mxu0 0.0
    %146 = vmatprep.subr.mxu0 0.0
    %147 = vmatpush1.msra.mxu0 0.0
    %148 = vmatprep.subr.mxu0 0.0
    %149 = vmatpush1.msra.mxu0 0.0
    %150 = vmatprep.subr.mxu0 0.0
    %151 = vmatpush1.msra.mxu0 0.0
    %152 = vmatprep.subr.mxu0 0.0
    %153 = vmatpush1.msra.mxu0 0.0
    %154 = vmatprep.subr.mxu0 0.0
    %155 = vmatpush1.msra.mxu0 0.0
    %156 = vmatprep.subr.mxu0 0.0
    %157 = vmatpush1.msra.mxu0 0.0
    %158 = vmatprep.subr.mxu0 0.0
    %159 = vmatpush1.msra.mxu0 0.0
    %160 = vmatprep.subr.mxu0 0.0
    %161 = vmatpush1.msra.mxu0 0.0
    %162 = vmatprep.subr.mxu0 0.0
    %163 = vmatpush1.msra.mxu0 0.0
    %164 = vmatprep.subr.mxu0 0.0
    %165 = vmatpush1.msra.mxu0 0.0
    %166 = vmatprep.subr.mxu0 0.0
    %167 = vmatpush1.msra.mxu0 0.0
    %168 = vmatprep.subr.mxu0 0.0
    %169 = vmatpush1.msra.mxu0 0.0
    %170 = vmatprep.mubr.f32.mxu0 0.0
    %171 = vmatmul.mubr.f32.gmra.mrb[0].mxu0 %v104
    %v172 = vpop.f32.mrb[0].mxu0
    %v173 = vadd.f32 %v98, %v172
    %v174 = vpop.f32.mrb[0].mxu0
    %175 = vdwg.mxu0
    %v177 = vcombine.high %v173, %v173
    %179 = vst [vmem:[#allocation2] sm:$0xf] %v173
    %180 = vst [vmem:[#allocation2 + $0x4] sm:$0xf] %v177
    %v181 = vld [vmem:[#allocation2] sm:$0x1]
    %v182 = vld [vmem:[#allocation2 + $0x4] sm:$0x1]
    %v184 = vsel %vm103, 0.0, 0
    %186 = vmatprep.subr.mxu0 0.0
    %187 = vmatpush1.msra.mxu0 %v83
    %188 = vmatprep.subr.mxu0 0.0
    %189 = vmatpush1.msra.mxu0 %v84
    %190 = vmatprep.subr.mxu0 0.0
    %191 = vmatpush1.msra.mxu0 %v85
    %192 = vmatprep.subr.mxu0 0.0
    %193 = vmatpush1.msra.mxu0 %v86
    %194 = vmatprep.subr.mxu0 0.0
    %195 = vmatpush1.msra.mxu0 0.0
    %196 = vmatprep.subr.mxu0 0.0
    %197 = vmatpush1.msra.mxu0 0.0
    %198 = vmatprep.subr.mxu0 0.0
    %199 = vmatpush1.msra.mxu0 0.0
    %200 = vmatprep.subr.mxu0 0.0
    %201 = vmatpush1.msra.mxu0 0.0
    %202 = vmatprep.subr.mxu0 0.0
    %203 = vmatpush1.msra.mxu0 0.0
    %204 = vmatprep.subr.mxu0 0.0
    %205 = vmatpush1.msra.mxu0 0.0
    %206 = vmatprep.subr.mxu0 0.0
    %207 = vmatpush1.msra.mxu0 0.0
    %208 = vmatprep.subr.mxu0 0.0
    %209 = vmatpush1.msra.mxu0 0.0
    %210 = vmatprep.subr.mxu0 0.0
    %211 = vmatpush1.msra.mxu0 0.0
    %212 = vmatprep.subr.mxu0 0.0
    %213 = vmatpush1.msra.mxu0 0.0
    %214 = vmatprep.subr.mxu0 0.0
    %215 = vmatpush1.msra.mxu0 0.0
    %216 = vmatprep.subr.mxu0 0.0
    %217 = vmatpush1.msra.mxu0 0.0
    %218 = vmatprep.subr.mxu0 0.0
    %219 = vmatpush1.msra.mxu0 0.0
    %220 = vmatprep.subr.mxu0 0.0
    %221 = vmatpush1.msra.mxu0 0.0
    %222 = vmatprep.subr.mxu0 0.0
    %223 = vmatpush1.msra.mxu0 0.0
    %224 = vmatprep.subr.mxu0 0.0
    %225 = vmatpush1.msra.mxu0 0.0
    %226 = vmatprep.subr.mxu0 0.0
    %227 = vmatpush1.msra.mxu0 0.0
    %228 = vmatprep.subr.mxu0 0.0
    %229 = vmatpush1.msra.mxu0 0.0
    %230 = vmatprep.subr.mxu0 0.0
    %231 = vmatpush1.msra.mxu0 0.0
    %232 = vmatprep.subr.mxu0 0.0
    %233 = vmatpush1.msra.mxu0 0.0
    %234 = vmatprep.subr.mxu0 0.0
    %235 = vmatpush1.msra.mxu0 0.0
    %236 = vmatprep.subr.mxu0 0.0
    %237 = vmatpush1.msra.mxu0 0.0
    %238 = vmatprep.subr.mxu0 0.0
    %239 = vmatpush1.msra.mxu0 0.0
    %240 = vmatprep.subr.mxu0 0.0
    %241 = vmatpush1.msra.mxu0 0.0
    %242 = vmatprep.subr.mxu0 0.0
    %243 = vmatpush1.msra.mxu0 0.0
    %244 = vmatprep.subr.mxu0 0.0
    %245 = vmatpush1.msra.mxu0 0.0
    %246 = vmatprep.subr.mxu0 0.0
    %247 = vmatpush1.msra.mxu0 0.0
    %248 = vmatprep.subr.mxu0 0.0
    %249 = vmatpush1.msra.mxu0 0.0
    %250 = vmatprep.mubr.f32.mxu0 0.0
    %251 = vmatmul.mubr.f32.gmra.mrb[0].mxu0 %v184
    %v252 = vpop.f32.mrb[0].mxu0
    %v253 = vadd.f32 0.0, %v252
    %v254 = vpop.f32.mrb[0].mxu0
    %255 = vdwg.mxu0
    %v257 = vrot.slane %v253, 1
    %v260 = vadd.f32 %v181, %v253
    %v261 = vadd.f32 %v182, %v257
    %v262 = vxor.u32 %v260, 2147483648
    %v263 = vxor.u32 %v261, 2147483648
    %v264 = vmul.f32 %v262, 1.442695
    %v265 = vpow.pop %v264
    %v266 = vmul.f32 %v263, 1.442695
    %v267 = vpow.pop %v266
    %v268 = vadd.f32 %v265, 1.0
    %v269 = vadd.f32 %v267, 1.0
    %v270 = vrcp.pop %v268
    %v271 = vmul.f32 1.0, %v270
    %v272 = vrcp.pop %v269
    %v273 = vmul.f32 1.0, %v272
    %v274 = vtanh.pop %v260
    %v275 = vtanh.pop %v261
    %v276 = vmul.f32 %v271, 0.0
    %v277 = vmul.f32 %v273, 0.0
    %280 = vrot.lane.b32.xlu0 %v274, 32
    %v281 = vpop.permute.xlu0 %280
    %282 = vrot.lane.b32.xlu0 %v275, 32
    %v283 = vpop.permute.xlu0 %282
    %v286 = vmul.f32 %v271, %v281
    %v287 = vmul.f32 %v273, %v283
    %290 = vrot.lane.b32.xlu0 %v286, 32
    %v291 = vpop.permute.xlu0 %290
    %292 = vrot.lane.b32.xlu0 %v287, 32
    %v293 = vpop.permute.xlu0 %292
    %v296 = vadd.f32 %v276, %v291
    %v297 = vadd.f32 %v277, %v293
    %v298 = vtanh.pop %v296
    %v299 = vtanh.pop %v297
    %302 = vrot.lane.b32.xlu0 %v298, 32
    %v303 = vpop.permute.xlu0 %302
    %304 = vrot.lane.b32.xlu0 %v299, 32
    %v305 = vpop.permute.xlu0 %304
    %v308 = vmul.f32 %v271, %v303
    %v309 = vmul.f32 %v273, %v305
    %vm310 = vcmp.gt.s32.totalorder %v82, 0
    %v311 = vsel %vm310, 1, 0
    %v312 = vcvt.s32.f32 %v311
    %314 = vset.pattern.permute.xlu0 0
    %315 = vperm.xlu0 %314, %v312
    %v316 = vpop.permute.xlu0 %315
    %v320 = vrot.slane %v297, 7
    %vm321 = vcmask 1041409
    %v322 = vsel %vm321, %v320, %v296
    %323 = vrot.lane.b32.xlu0 %v322, 96
    %v324 = vpop.permute.xlu0 %323
    %v326 = vmul.f32 %v316, %v324
    %v327 = vadd.f32 %v326, 0.0
    %v330 = vrot.slane %v309, 7
    %v331 = vsel %vm321, %v330, %v308
    %332 = vrot.lane.b32.xlu0 %v331, 64
    %v333 = vpop.permute.xlu0 %332
    %v335 = vmul.f32 %v316, %v333
    %v336 = vadd.f32 %v335, 0.0
    %v337 = vld [vmem:[#allocation2 + $0x1] sm:$0x1]
    %v338 = vld [vmem:[#allocation2 + $0x5] sm:$0x1]
    %v340 = vsel %vm103, %v336, 0
    %342 = vmatprep.subr.mxu0 0.0
    %343 = vmatpush1.msra.mxu0 %v83
    %344 = vmatprep.subr.mxu0 0.0
    %345 = vmatpush1.msra.mxu0 %v84
    %346 = vmatprep.subr.mxu0 0.0
    %347 = vmatpush1.msra.mxu0 %v85
    %348 = vmatprep.subr.mxu0 0.0
    %349 = vmatpush1.msra.mxu0 %v86
    %350 = vmatprep.subr.mxu0 0.0
    %351 = vmatpush1.msra.mxu0 0.0
    %352 = vmatprep.subr.mxu0 0.0
    %353 = vmatpush1.msra.mxu0 0.0
    %354 = vmatprep.subr.mxu0 0.0
    %355 = vmatpush1.msra.mxu0 0.0
    %356 = vmatprep.subr.mxu0 0.0
    %357 = vmatpush1.msra.mxu0 0.0
    %358 = vmatprep.subr.mxu0 0.0
    %359 = vmatpush1.msra.mxu0 0.0
    %360 = vmatprep.subr.mxu0 0.0
    %361 = vmatpush1.msra.mxu0 0.0
    %362 = vmatprep.subr.mxu0 0.0
    %363 = vmatpush1.msra.mxu0 0.0
    %364 = vmatprep.subr.mxu0 0.0
    %365 = vmatpush1.msra.mxu0 0.0
    %366 = vmatprep.subr.mxu0 0.0
    %367 = vmatpush1.msra.mxu0 0.0
    %368 = vmatprep.subr.mxu0 0.0
    %369 = vmatpush1.msra.mxu0 0.0
    %370 = vmatprep.subr.mxu0 0.0
    %371 = vmatpush1.msra.mxu0 0.0
    %372 = vmatprep.subr.mxu0 0.0
    %373 = vmatpush1.msra.mxu0 0.0
    %374 = vmatprep.subr.mxu0 0.0
    %375 = vmatpush1.msra.mxu0 0.0
    %376 = vmatprep.subr.mxu0 0.0
    %377 = vmatpush1.msra.mxu0 0.0
    %378 = vmatprep.subr.mxu0 0.0
    %379 = vmatpush1.msra.mxu0 0.0
    %380 = vmatprep.subr.mxu0 0.0
    %381 = vmatpush1.msra.mxu0 0.0
    %382 = vmatprep.subr.mxu0 0.0
    %383 = vmatpush1.msra.mxu0 0.0
    %384 = vmatprep.subr.mxu0 0.0
    %385 = vmatpush1.msra.mxu0 0.0
    %386 = vmatprep.subr.mxu0 0.0
    %387 = vmatpush1.msra.mxu0 0.0
    %388 = vmatprep.subr.mxu0 0.0
    %389 = vmatpush1.msra.mxu0 0.0
    %390 = vmatprep.subr.mxu0 0.0
    %391 = vmatpush1.msra.mxu0 0.0
    %392 = vmatprep.subr.mxu0 0.0
    %393 = vmatpush1.msra.mxu0 0.0
    %394 = vmatprep.subr.mxu0 0.0
    %395 = vmatpush1.msra.mxu0 0.0
    %396 = vmatprep.subr.mxu0 0.0
    %397 = vmatpush1.msra.mxu0 0.0
    %398 = vmatprep.subr.mxu0 0.0
    %399 = vmatpush1.msra.mxu0 0.0
    %400 = vmatprep.subr.mxu0 0.0
    %401 = vmatpush1.msra.mxu0 0.0
    %402 = vmatprep.subr.mxu0 0.0
    %403 = vmatpush1.msra.mxu0 0.0
    %404 = vmatprep.subr.mxu0 0.0
    %405 = vmatpush1.msra.mxu0 0.0
    %406 = vmatprep.mubr.f32.mxu0 0.0
    %407 = vmatmul.mubr.f32.gmra.mrb[0].mxu0 %v340
    %v408 = vpop.f32.mrb[0].mxu0
    %v409 = vadd.f32 0.0, %v408
    %v410 = vpop.f32.mrb[0].mxu0
    %411 = vdwg.mxu0
    %v413 = vrot.slane %v409, 1
    %v416 = vadd.f32 %v337, %v409
    %v417 = vadd.f32 %v338, %v413
    %v418 = vxor.u32 %v416, 2147483648
    %v419 = vxor.u32 %v417, 2147483648
    %v420 = vmul.f32 %v418, 1.442695
    %v421 = vpow.pop %v420
    %v422 = vmul.f32 %v419, 1.442695
    %v423 = vpow.pop %v422
    %v424 = vadd.f32 %v421, 1.0
    %v425 = vadd.f32 %v423, 1.0
    %v426 = vrcp.pop %v424
    %v427 = vmul.f32 1.0, %v426
    %v428 = vrcp.pop %v425
    %v429 = vmul.f32 1.0, %v428
    %v430 = vtanh.pop %v416
    %v431 = vtanh.pop %v417
    %v433 = vrot.slane %v327, 1
    %434 = vrot.lane.b32.xlu0 %v327, 32
    %v435 = vpop.permute.xlu0 %434
    %436 = vrot.lane.b32.xlu0 %v433, 32
    %v437 = vpop.permute.xlu0 %436
    %v440 = vmul.f32 %v427, %v435
    %v441 = vmul.f32 %v429, %v437
    %444 = vrot.lane.b32.xlu0 %v430, 32
    %v445 = vpop.permute.xlu0 %444
    %446 = vrot.lane.b32.xlu0 %v431, 32
    %v447 = vpop.permute.xlu0 %446
    %v450 = vmul.f32 %v427, %v445
    %v451 = vmul.f32 %v429, %v447
    %454 = vrot.lane.b32.xlu0 %v450, 32
    %v455 = vpop.permute.xlu0 %454
    %456 = vrot.lane.b32.xlu0 %v451, 32
    %v457 = vpop.permute.xlu0 %456
    %v460 = vadd.f32 %v440, %v455
    %v461 = vadd.f32 %v441, %v457
    %v462 = vtanh.pop %v460
    %v463 = vtanh.pop %v461
    %466 = vrot.lane.b32.xlu0 %v462, 32
    %v467 = vpop.permute.xlu0 %466
    %468 = vrot.lane.b32.xlu0 %v463, 32
    %v469 = vpop.permute.xlu0 %468
    %v472 = vmul.f32 %v427, %v467
    %v473 = vmul.f32 %v429, %v469
    %vm474 = vcmp.gt.s32.totalorder %v82, 1
    %v475 = vsel %vm474, 1, 0
    %v476 = vcvt.s32.f32 %v475
    %v477 = vsub.f32 %v460, %v435
    %v478 = vsub.f32 %v461, %v437
    %480 = vset.pattern.permute.xlu0 0
    %481 = vperm.xlu0 %480, %v476
    %v482 = vpop.permute.xlu0 %481
    %v486 = vrot.slane %v478, 7
    %v487 = vsel %vm321, %v486, %v477
    %488 = vrot.lane.b32.xlu0 %v487, 96
    %v489 = vpop.permute.xlu0 %488
    %v491 = vmul.f32 %v482, %v489
    %v492 = vadd.f32 %v327, %v491
    %v493 = vrot.slane %v336, 1
    %494 = vrot.lane.b32.xlu0 %v336, 64
    %v495 = vpop.permute.xlu0 %494
    %496 = vrot.lane.b32.xlu0 %v493, 64
    %v497 = vpop.permute.xlu0 %496
    %v500 = vsub.f32 %v472, %v495
    %v501 = vsub.f32 %v473, %v497
    %v504 = vrot.slane %v501, 7
    %v505 = vsel %vm321, %v504, %v500
    %506 = vrot.lane.b32.xlu0 %v505, 64
    %v507 = vpop.permute.xlu0 %506
    %v509 = vmul.f32 %v482, %v507
    %v510 = vadd.f32 %v336, %v509
    %v511 = vld [vmem:[#allocation2 + $0x2] sm:$0x1]
    %v512 = vld [vmem:[#allocation2 + $0x6] sm:$0x1]
    %v514 = vsel %vm103, %v510, 0
    %516 = vmatprep.subr.mxu0 0.0
    %517 = vmatpush1.msra.mxu0 %v83
    %518 = vmatprep.subr.mxu0 0.0
    %519 = vmatpush1.msra.mxu0 %v84
    %520 = vmatprep.subr.mxu0 0.0
    %521 = vmatpush1.msra.mxu0 %v85
    %522 = vmatprep.subr.mxu0 0.0
    %523 = vmatpush1.msra.mxu0 %v86
    %524 = vmatprep.subr.mxu0 0.0
    %525 = vmatpush1.msra.mxu0 0.0
    %526 = vmatprep.subr.mxu0 0.0
    %527 = vmatpush1.msra.mxu0 0.0
    %528 = vmatprep.subr.mxu0 0.0
    %529 = vmatpush1.msra.mxu0 0.0
    %530 = vmatprep.subr.mxu0 0.0
    %531 = vmatpush1.msra.mxu0 0.0
    %532 = vmatprep.subr.mxu0 0.0
    %533 = vmatpush1.msra.mxu0 0.0
    %534 = vmatprep.subr.mxu0 0.0
    %535 = vmatpush1.msra.mxu0 0.0
    %536 = vmatprep.subr.mxu0 0.0
    %537 = vmatpush1.msra.mxu0 0.0
    %538 = vmatprep.subr.mxu0 0.0
    %539 = vmatpush1.msra.mxu0 0.0
    %540 = vmatprep.subr.mxu0 0.0
    %541 = vmatpush1.msra.mxu0 0.0
    %542 = vmatprep.subr.mxu0 0.0
    %543 = vmatpush1.msra.mxu0 0.0
    %544 = vmatprep.subr.mxu0 0.0
    %545 = vmatpush1.msra.mxu0 0.0
    %546 = vmatprep.subr.mxu0 0.0
    %547 = vmatpush1.msra.mxu0 0.0
    %548 = vmatprep.subr.mxu0 0.0
    %549 = vmatpush1.msra.mxu0 0.0
    %550 = vmatprep.subr.mxu0 0.0
    %551 = vmatpush1.msra.mxu0 0.0
    %552 = vmatprep.subr.mxu0 0.0
    %553 = vmatpush1.msra.mxu0 0.0
    %554 = vmatprep.subr.mxu0 0.0
    %555 = vmatpush1.msra.mxu0 0.0
    %556 = vmatprep.subr.mxu0 0.0
    %557 = vmatpush1.msra.mxu0 0.0
    %558 = vmatprep.subr.mxu0 0.0
    %559 = vmatpush1.msra.mxu0 0.0
    %560 = vmatprep.subr.mxu0 0.0
    %561 = vmatpush1.msra.mxu0 0.0
    %562 = vmatprep.subr.mxu0 0.0
    %563 = vmatpush1.msra.mxu0 0.0
    %564 = vmatprep.subr.mxu0 0.0
    %565 = vmatpush1.msra.mxu0 0.0
    %566 = vmatprep.subr.mxu0 0.0
    %567 = vmatpush1.msra.mxu0 0.0
    %568 = vmatprep.subr.mxu0 0.0
    %569 = vmatpush1.msra.mxu0 0.0
    %570 = vmatprep.subr.mxu0 0.0
    %571 = vmatpush1.msra.mxu0 0.0
    %572 = vmatprep.subr.mxu0 0.0
    %573 = vmatpush1.msra.mxu0 0.0
    %574 = vmatprep.subr.mxu0 0.0
    %575 = vmatpush1.msra.mxu0 0.0
    %576 = vmatprep.subr.mxu0 0.0
    %577 = vmatpush1.msra.mxu0 0.0
    %578 = vmatprep.subr.mxu0 0.0
    %579 = vmatpush1.msra.mxu0 0.0
    %580 = vmatprep.mubr.f32.mxu0 0.0
    %581 = vmatmul.mubr.f32.gmra.mrb[0].mxu0 %v514
    %v582 = vpop.f32.mrb[0].mxu0
    %v583 = vadd.f32 0.0, %v582
    %v584 = vpop.f32.mrb[0].mxu0
    %585 = vdwg.mxu0
    %v587 = vrot.slane %v583, 1
    %v590 = vadd.f32 %v511, %v583
    %v591 = vadd.f32 %v512, %v587
    %v592 = vxor.u32 %v590, 2147483648
    %v593 = vxor.u32 %v591, 2147483648
    %v594 = vmul.f32 %v592, 1.442695
    %v595 = vpow.pop %v594
    %v596 = vmul.f32 %v593, 1.442695
    %v597 = vpow.pop %v596
    %v598 = vadd.f32 %v595, 1.0
    %v599 = vadd.f32 %v597, 1.0
    %v600 = vrcp.pop %v598
    %v601 = vmul.f32 1.0, %v600
    %v602 = vrcp.pop %v599
    %v603 = vmul.f32 1.0, %v602
    %v604 = vtanh.pop %v590
    %v605 = vtanh.pop %v591
    %v607 = vrot.slane %v492, 1
    %608 = vrot.lane.b32.xlu0 %v492, 32
    %v609 = vpop.permute.xlu0 %608
    %610 = vrot.lane.b32.xlu0 %v607, 32
    %v611 = vpop.permute.xlu0 %610
    %v614 = vmul.f32 %v601, %v609
    %v615 = vmul.f32 %v603, %v611
    %618 = vrot.lane.b32.xlu0 %v604, 32
    %v619 = vpop.permute.xlu0 %618
    %620 = vrot.lane.b32.xlu0 %v605, 32
    %v621 = vpop.permute.xlu0 %620
    %v624 = vmul.f32 %v601, %v619
    %v625 = vmul.f32 %v603, %v621
    %628 = vrot.lane.b32.xlu0 %v624, 32
    %v629 = vpop.permute.xlu0 %628
    %630 = vrot.lane.b32.xlu0 %v625, 32
    %v631 = vpop.permute.xlu0 %630
    %v634 = vadd.f32 %v614, %v629
    %v635 = vadd.f32 %v615, %v631
    %v636 = vtanh.pop %v634
    %v637 = vtanh.pop %v635
    %640 = vrot.lane.b32.xlu0 %v636, 32
    %v641 = vpop.permute.xlu0 %640
    %642 = vrot.lane.b32.xlu0 %v637, 32
    %v643 = vpop.permute.xlu0 %642
    %v646 = vmul.f32 %v601, %v641
    %v647 = vmul.f32 %v603, %v643
    %vm648 = vcmp.gt.s32.totalorder %v82, 2
    %v649 = vsel %vm648, 1, 0
    %v650 = vcvt.s32.f32 %v649
    %v651 = vsub.f32 %v634, %v609
    %v652 = vsub.f32 %v635, %v611
    %654 = vset.pattern.permute.xlu0 0
    %655 = vperm.xlu0 %654, %v650
    %v656 = vpop.permute.xlu0 %655
    %v660 = vrot.slane %v652, 7
    %v661 = vsel %vm321, %v660, %v651
    %662 = vrot.lane.b32.xlu0 %v661, 96
    %v663 = vpop.permute.xlu0 %662
    %v665 = vmul.f32 %v656, %v663
    %v666 = vadd.f32 %v492, %v665
    %v667 = vrot.slane %v510, 1
    %668 = vrot.lane.b32.xlu0 %v510, 64
    %v669 = vpop.permute.xlu0 %668
    %670 = vrot.lane.b32.xlu0 %v667, 64
    %v671 = vpop.permute.xlu0 %670
    %v674 = vsub.f32 %v646, %v669
    %v675 = vsub.f32 %v647, %v671
    %v678 = vrot.slane %v675, 7
    %v679 = vsel %vm321, %v678, %v674
    %680 = vrot.lane.b32.xlu0 %v679, 64
    %v681 = vpop.permute.xlu0 %680
    %v683 = vmul.f32 %v656, %v681
    %v684 = vadd.f32 %v510, %v683
    %v685 = vld [vmem:[#allocation2 + $0x3] sm:$0x1]
    %v686 = vld [vmem:[#allocation2 + $0x7] sm:$0x1]
    %v688 = vsel %vm103, %v684, 0
    %690 = vmatprep.subr.mxu0 0.0
    %691 = vmatpush1.msra.mxu0 %v83
    %692 = vmatprep.subr.mxu0 0.0
    %693 = vmatpush1.msra.mxu0 %v84
    %694 = vmatprep.subr.mxu0 0.0
    %695 = vmatpush1.msra.mxu0 %v85
    %696 = vmatprep.subr.mxu0 0.0
    %697 = vmatpush1.msra.mxu0 %v86
    %698 = vmatprep.subr.mxu0 0.0
    %699 = vmatpush1.msra.mxu0 0.0
    %700 = vmatprep.subr.mxu0 0.0
    %701 = vmatpush1.msra.mxu0 0.0
    %702 = vmatprep.subr.mxu0 0.0
    %703 = vmatpush1.msra.mxu0 0.0
    %704 = vmatprep.subr.mxu0 0.0
    %705 = vmatpush1.msra.mxu0 0.0
    %706 = vmatprep.subr.mxu0 0.0
    %707 = vmatpush1.msra.mxu0 0.0
    %708 = vmatprep.subr.mxu0 0.0
    %709 = vmatpush1.msra.mxu0 0.0
    %710 = vmatprep.subr.mxu0 0.0
    %711 = vmatpush1.msra.mxu0 0.0
    %712 = vmatprep.subr.mxu0 0.0
    %713 = vmatpush1.msra.mxu0 0.0
    %714 = vmatprep.subr.mxu0 0.0
    %715 = vmatpush1.msra.mxu0 0.0
    %716 = vmatprep.subr.mxu0 0.0
    %717 = vmatpush1.msra.mxu0 0.0
    %718 = vmatprep.subr.mxu0 0.0
    %719 = vmatpush1.msra.mxu0 0.0
    %720 = vmatprep.subr.mxu0 0.0
    %721 = vmatpush1.msra.mxu0 0.0
    %722 = vmatprep.subr.mxu0 0.0
    %723 = vmatpush1.msra.mxu0 0.0
    %724 = vmatprep.subr.mxu0 0.0
    %725 = vmatpush1.msra.mxu0 0.0
    %726 = vmatprep.subr.mxu0 0.0
    %727 = vmatpush1.msra.mxu0 0.0
    %728 = vmatprep.subr.mxu0 0.0
    %729 = vmatpush1.msra.mxu0 0.0
    %730 = vmatprep.subr.mxu0 0.0
    %731 = vmatpush1.msra.mxu0 0.0
    %732 = vmatprep.subr.mxu0 0.0
    %733 = vmatpush1.msra.mxu0 0.0
    %734 = vmatprep.subr.mxu0 0.0
    %735 = vmatpush1.msra.mxu0 0.0
    %736 = vmatprep.subr.mxu0 0.0
    %737 = vmatpush1.msra.mxu0 0.0
    %738 = vmatprep.subr.mxu0 0.0
    %739 = vmatpush1.msra.mxu0 0.0
    %740 = vmatprep.subr.mxu0 0.0
    %741 = vmatpush1.msra.mxu0 0.0
    %742 = vmatprep.subr.mxu0 0.0
    %743 = vmatpush1.msra.mxu0 0.0
    %744 = vmatprep.subr.mxu0 0.0
    %745 = vmatpush1.msra.mxu0 0.0
    %746 = vmatprep.subr.mxu0 0.0
    %747 = vmatpush1.msra.mxu0 0.0
    %748 = vmatprep.subr.mxu0 0.0
    %749 = vmatpush1.msra.mxu0 0.0
    %750 = vmatprep.subr.mxu0 0.0
    %751 = vmatpush1.msra.mxu0 0.0
    %752 = vmatprep.subr.mxu0 0.0
    %753 = vmatpush1.msra.mxu0 0.0
    %754 = vmatprep.mubr.f32.mxu0 0.0
    %755 = vmatmul.mubr.f32.gmra.mrb[0].mxu0 %v688
    %v756 = vpop.f32.mrb[0].mxu0
    %v757 = vadd.f32 0.0, %v756
    %v758 = vpop.f32.mrb[0].mxu0
    %759 = vdwg.mxu0
    %v761 = vrot.slane %v757, 1
    %v764 = vadd.f32 %v685, %v757
    %v765 = vadd.f32 %v686, %v761
    %v766 = vxor.u32 %v764, 2147483648
    %v767 = vxor.u32 %v765, 2147483648
    %v768 = vmul.f32 %v766, 1.442695
    %v769 = vpow.pop %v768
    %v770 = vmul.f32 %v767, 1.442695
    %v771 = vpow.pop %v770
    %v772 = vadd.f32 %v769, 1.0
    %v773 = vadd.f32 %v771, 1.0
    %v774 = vrcp.pop %v772
    %v775 = vmul.f32 1.0, %v774
    %v776 = vrcp.pop %v773
    %v777 = vmul.f32 1.0, %v776
    %v778 = vtanh.pop %v764
    %v779 = vtanh.pop %v765
    %v781 = vrot.slane %v666, 1
    %782 = vrot.lane.b32.xlu0 %v666, 32
    %v783 = vpop.permute.xlu0 %782
    %784 = vrot.lane.b32.xlu0 %v781, 32
    %v785 = vpop.permute.xlu0 %784
    %v788 = vmul.f32 %v775, %v783
    %v789 = vmul.f32 %v777, %v785
    %792 = vrot.lane.b32.xlu0 %v778, 32
    %v793 = vpop.permute.xlu0 %792
    %794 = vrot.lane.b32.xlu0 %v779, 32
    %v795 = vpop.permute.xlu0 %794
    %v798 = vmul.f32 %v775, %v793
    %v799 = vmul.f32 %v777, %v795
    %802 = vrot.lane.b32.xlu0 %v798, 32
    %v803 = vpop.permute.xlu0 %802
    %804 = vrot.lane.b32.xlu0 %v799, 32
    %v805 = vpop.permute.xlu0 %804
    %v808 = vadd.f32 %v788, %v803
    %v809 = vadd.f32 %v789, %v805
    %v810 = vtanh.pop %v808
    %v811 = vtanh.pop %v809
    %814 = vrot.lane.b32.xlu0 %v810, 32
    %v815 = vpop.permute.xlu0 %814
    %816 = vrot.lane.b32.xlu0 %v811, 32
    %v817 = vpop.permute.xlu0 %816
    %v820 = vmul.f32 %v775, %v815
    %v821 = vmul.f32 %v777, %v817
    %vm822 = vcmp.gt.s32.totalorder %v82, 3
    %v823 = vsel %vm822, 1, 0
    %v824 = vcvt.s32.f32 %v823
    %v825 = vrot.slane %v684, 1
    %826 = vrot.lane.b32.xlu0 %v684, 64
    %v827 = vpop.permute.xlu0 %826
    %828 = vrot.lane.b32.xlu0 %v825, 64
    %v829 = vpop.permute.xlu0 %828
    %v832 = vsub.f32 %v820, %v827
    %v833 = vsub.f32 %v821, %v829
    %835 = vset.pattern.permute.xlu0 0
    %836 = vperm.xlu0 %835, %v824
    %v837 = vpop.permute.xlu0 %836
    %v841 = vrot.slane %v833, 7
    %v842 = vsel %vm321, %v841, %v832
    %843 = vrot.lane.b32.xlu0 %v842, 64
    %v844 = vpop.permute.xlu0 %843
    %v846 = vmul.f32 %v837, %v844
    %v847 = vadd.f32 %v684, %v846
    %v848 = vld [vmem:[#allocation9] sm:$0xff]
    %v849 = vld [vmem:[#allocation9 + $0x8] sm:$0xff]
    %v850 = vld [vmem:[#allocation9 + $0x10] sm:$0xff]
    %v851 = vld [vmem:[#allocation9 + $0x18] sm:$0xff]
    %v852 = vld [vmem:[%s6] sm:$0x1]
    %v854 = vlaneseq
    %v855 = vshrl.u32 %v854, 7
    %v856 = vsub.s32 0, %v855
    %v857 = vrot.slane %v852, %v856
    %v860 = vsel %vm103, %v847, 0
    %862 = vmatprep.subr.mxu0 0.0
    %863 = vmatpush1.msra.mxu0 %v848
    %864 = vmatprep.subr.mxu0 0.0
    %865 = vmatpush1.msra.mxu0 %v849
    %866 = vmatprep.subr.mxu0 0.0
    %867 = vmatpush1.msra.mxu0 %v850
    %868 = vmatprep.subr.mxu0 0.0
    %869 = vmatpush1.msra.mxu0 %v851
    %870 = vmatprep.subr.mxu0 0.0
    %871 = vmatpush1.msra.mxu0 0.0
    %872 = vmatprep.subr.mxu0 0.0
    %873 = vmatpush1.msra.mxu0 0.0
    %874 = vmatprep.subr.mxu0 0.0
    %875 = vmatpush1.msra.mxu0 0.0
    %876 = vmatprep.subr.mxu0 0.0
    %877 = vmatpush1.msra.mxu0 0.0
    %878 = vmatprep.subr.mxu0 0.0
    %879 = vmatpush1.msra.mxu0 0.0
    %880 = vmatprep.subr.mxu0 0.0
    %881 = vmatpush1.msra.mxu0 0.0
    %882 = vmatprep.subr.mxu0 0.0
    %883 = vmatpush1.msra.mxu0 0.0
    %884 = vmatprep.subr.mxu0 0.0
    %885 = vmatpush1.msra.mxu0 0.0
    %886 = vmatprep.subr.mxu0 0.0
    %887 = vmatpush1.msra.mxu0 0.0
    %888 = vmatprep.subr.mxu0 0.0
    %889 = vmatpush1.msra.mxu0 0.0
    %890 = vmatprep.subr.mxu0 0.0
    %891 = vmatpush1.msra.mxu0 0.0
    %892 = vmatprep.subr.mxu0 0.0
    %893 = vmatpush1.msra.mxu0 0.0
    %894 = vmatprep.subr.mxu0 0.0
    %895 = vmatpush1.msra.mxu0 0.0
    %896 = vmatprep.subr.mxu0 0.0
    %897 = vmatpush1.msra.mxu0 0.0
    %898 = vmatprep.subr.mxu0 0.0
    %899 = vmatpush1.msra.mxu0 0.0
    %900 = vmatprep.subr.mxu0 0.0
    %901 = vmatpush1.msra.mxu0 0.0
    %902 = vmatprep.subr.mxu0 0.0
    %903 = vmatpush1.msra.mxu0 0.0
    %904 = vmatprep.subr.mxu0 0.0
    %905 = vmatpush1.msra.mxu0 0.0
    %906 = vmatprep.subr.mxu0 0.0
    %907 = vmatpush1.msra.mxu0 0.0
    %908 = vmatprep.subr.mxu0 0.0
    %909 = vmatpush1.msra.mxu0 0.0
    %910 = vmatprep.subr.mxu0 0.0
    %911 = vmatpush1.msra.mxu0 0.0
    %912 = vmatprep.subr.mxu0 0.0
    %913 = vmatpush1.msra.mxu0 0.0
    %914 = vmatprep.subr.mxu0 0.0
    %915 = vmatpush1.msra.mxu0 0.0
    %916 = vmatprep.subr.mxu0 0.0
    %917 = vmatpush1.msra.mxu0 0.0
    %918 = vmatprep.subr.mxu0 0.0
    %919 = vmatpush1.msra.mxu0 0.0
    %920 = vmatprep.subr.mxu0 0.0
    %921 = vmatpush1.msra.mxu0 0.0
    %922 = vmatprep.subr.mxu0 0.0
    %923 = vmatpush1.msra.mxu0 0.0
    %924 = vmatprep.subr.mxu0 0.0
    %925 = vmatpush1.msra.mxu0 0.0
    %926 = vmatprep.mubr.f32.mxu0 0.0
    %927 = vmatmul.mubr.f32.gmra.mrb[0].mxu0 %v860
    %v928 = vpop.f32.mrb[0].mxu0
    %v929 = vadd.f32 %v857, %v928
    %v930 = vpop.f32.mrb[0].mxu0
    %931 = vdwg.mxu0
    %vm932 = vcmask 254976
    %933 = vst.msk [vmem:[#allocation11] sm:$0x3] %vm932, %v929
    // Predicated region
    $region46: #{tpu_custom_call.1} parent=1 // pred_check
      _
    $region47: #{tpu_custom_call.1} parent=1 // pred_check_branch
      %935 = sbr.rel (0) target = $region49
    $region48: #{tpu_custom_call.1} parent=1 // pred_region
      %s937 = ssub.s32 32, 32
      %938 = vsyncadd [#allocation5], %s937
      %s940 = sshll.u32 [#allocation11], 4
      %s941 = int_to_ptr.vmem [resolvable:$true] %s940
      %943 = dma.vmem_to_hbm [thread:$0]  %s941, 32, %s7, [#allocation5]
    $region49: #{tpu_custom_call.1} parent=1 // pred_fallthru
      _
    // Predicated region
    $region50: #{tpu_custom_call.1} parent=1 // pred_check
      _
    $region51: #{tpu_custom_call.1} parent=1 // pred_check_branch
      %945 = sbr.rel (0) target = $region53
    $region52: #{tpu_custom_call.1} parent=1 // pred_region
      %946 = dma.done [#allocation5], 32
    $region53: #{tpu_custom_call.1} parent=1 // pred_fallthru
      _
    %947 = vsyncpa [#allocation4], 1
    %948 = vsyncpa [#allocation7], 1
    %949 = vsyncpa [#allocation10], 1
    %950 = vsyncpa [#allocation5], 1

</llo_original>
